<compile_context>
chip_gen: v7x
topology: tpu7x:2x2x1
jax: 0.10.0
libtpu: 0.0.40
codegen_flags: <defaults>
</compile_context>

<pallas_src>
import jax
import jax.numpy as jnp
from jax import lax
from jax.experimental import pallas as pl
from jax.experimental.pallas import tpu as pltpu


def _gap_kernel(x_ref, n_ref, w_ref, b_ref, out_ref, attn_ref):
    tb, n_max, d = x_ref.shape

    x = x_ref[...]                                  # (TB, N, D) native dtype
    w_row = w_ref[...]                              # (1, D)     same dtype as x
    counts = n_ref[...]                             # (TB, 1, 1) int32
    bias = b_ref[0, 0]                              # scalar f32 from SMEM

    # gate_nn logits, computed directly in the lane-dense (TB, 1, N) layout:
    # per-node dot(x, w) on the MXU (same pattern as flash-attention q.k^T).
    w_b = jnp.broadcast_to(w_row.reshape(1, 1, d), (tb, 1, d))
    logits = jnp.einsum("bkd,bnd->bkn", w_b, x,
                        preferred_element_type=jnp.float32) + bias   # (TB,1,N)

    # Mask padding nodes, then segment softmax over the node (lane) axis.
    node_idx = lax.broadcasted_iota(jnp.int32, (tb, 1, n_max), 2)
    valid = node_idx < counts                                        # (TB,1,N)
    logits = jnp.where(valid, logits, -jnp.inf)
    m = jnp.max(logits, axis=2, keepdims=True)                       # (TB,1,1)
    e = jnp.where(valid, jnp.exp(logits - m), 0.0)                   # (TB,1,N)
    denom = jnp.sum(e, axis=2, keepdims=True)                        # (TB,1,1)
    # Exact division (pl.reciprocal(approx=True) would be a free EUP op but
    # costs precision vs. the reference). Note: n_nodes == 0 yields NaN, same
    # as the pure-JAX / DGL behavior for an empty graph.
    gate = e / denom                                                 # (TB,1,N) f32

    # Lane-dense attention store (nodes on the lane axis).
    attn_ref[...] = gate.astype(attn_ref.dtype)

    # Gate-weighted feature sum on the MXU (flash-attention P.V pattern),
    # f32 accumulation, x kept in its stored dtype.
    readout = jnp.einsum("bqn,bnd->bqd", gate.astype(x.dtype), x,
                         preferred_element_type=jnp.float32)         # (TB,1,D)
    out_ref[...] = readout.astype(out_ref.dtype)


def _choose_batch_tile(B, N, D, itemsize, budget_bytes=24 * 1024 * 1024):
    """Pick graphs-per-step TB so double-buffered blocks fit a ~24 MiB budget
    (kept well under the 32 MiB scoped-VMEM limit we request, which is safe on
    v5e/v6e and on v7x's 64 MiB per-TC VMEM)."""
    d_pad = max(D, 128)
    n_pad = max(N, 128)
    per_graph = 2 * N * d_pad * itemsize          # x block, double-buffered
    per_graph += 2 * 4 * (d_pad + n_pad)          # readout + attn out blocks
    per_graph += 4 * (d_pad + 3 * n_pad)          # f32 intermediates
    tb = budget_bytes // max(per_graph, 1)
    return int(max(1, min(tb, B, 512)))


def global_attention_pooling(x, n_nodes, w_gate, b_gate):
    """x: (B, N_max, D); n_nodes: (B,) int; w_gate: (D, 1); b_gate: (1, 1).

    Returns (readout (B, D) in x.dtype, attention (B, N_max, 1) float32)."""
    B, N, D = x.shape
    itemsize = jnp.dtype(x.dtype).itemsize

    tb = _choose_batch_tile(B, N, D, itemsize)
    num_tiles = -(-B // tb)
    # If everything fits in one tile, split into two steps so the "parallel"
    # grid axis can be sharded across v7x's 2 TensorCores (no-op on v5e/v6e).
    if num_tiles == 1 and B > 1:
        tb = -(-B // 2)
        num_tiles = -(-B // tb)
    b_pad = num_tiles * tb

    if b_pad != B:
        x = jnp.pad(x, ((0, b_pad - B), (0, 0), (0, 0)))
        # Pad graphs get 1 "node" of zero features so the softmax stays finite.
        n_nodes = jnp.pad(n_nodes, (0, b_pad - B), constant_values=1)

    n3 = n_nodes.astype(jnp.int32).reshape(b_pad, 1, 1)
    w_row = w_gate.reshape(1, D).astype(x.dtype)          # lane-dense gate weights
    b_s = b_gate.reshape(1, 1).astype(jnp.float32)        # scalar bias -> SMEM

    readout, attn = pl.pallas_call(
        _gap_kernel,
        out_shape=(
            jax.ShapeDtypeStruct((b_pad, 1, D), x.dtype),        # readout
            jax.ShapeDtypeStruct((b_pad, 1, N), jnp.float32),    # attention (lane-dense)
        ),
        grid_spec=pltpu.PrefetchScalarGridSpec(
            num_scalar_prefetch=0,
            grid=(num_tiles,),
            in_specs=[
                pl.BlockSpec((tb, N, D), lambda g: (g, 0, 0)),   # x tile
                pl.BlockSpec((tb, 1, 1), lambda g: (g, 0, 0)),   # node counts
                pl.BlockSpec((1, D), lambda g: (0, 0)),          # gate weights
                pl.BlockSpec(memory_space=pltpu.MemorySpace.SMEM),  # gate bias
            ],
            out_specs=[
                pl.BlockSpec((tb, 1, D), lambda g: (g, 0, 0)),
                pl.BlockSpec((tb, 1, N), lambda g: (g, 0, 0)),
            ],
        ),
        compiler_params=pltpu.CompilerParams(
            dimension_semantics=("parallel",),
            vmem_limit_bytes=32 * 1024 * 1024,
        ),
    )(x, n3, w_row, b_s)

    readout = readout.reshape(b_pad, D)[:B]
    attn = attn.reshape(b_pad, N)[:B][:, :, None]          # -> (B, N, 1)
    return readout, attn


def _reference(x, n_nodes, w_gate, b_gate):
    """Pure-JAX reference of the same segment softmax pooling."""
    B, N, D = x.shape
    logits = jnp.einsum("bnd,do->bno", x, w_gate) + b_gate[0, 0]     # (B, N, 1)
    valid = (jnp.arange(N)[None, :, None] < n_nodes[:, None, None])
    logits = jnp.where(valid, logits, -jnp.inf)
    m = jnp.max(logits, axis=1, keepdims=True)
    e = jnp.where(valid, jnp.exp(logits - m), 0.0)
    gate = e / jnp.sum(e, axis=1, keepdims=True)
    readout = jnp.sum(gate * x, axis=1)
    return readout, gate


if __name__ == "__main__":
    B, N_MAX, D = 2, 8, 32

    key = jax.random.PRNGKey(0)
    kx, kw, kb = jax.random.split(key, 3)

    x = jax.random.normal(kx, (B, N_MAX, D), dtype=jnp.float32)
    # ragged graphs: first graph has 8 nodes, second has 5 (padded rows ignored)
    n_nodes = jnp.array([8, 5], dtype=jnp.int32)

    # deterministic gate_nn = Linear(D, 1) parameters
    w_gate = jax.random.normal(kw, (D, 1), dtype=jnp.float32) * 0.1
    b_gate = jax.random.normal(kb, (1, 1), dtype=jnp.float32) * 0.1

    readout, attn = global_attention_pooling(x, n_nodes, w_gate, b_gate)
    readout = jax.block_until_ready(readout)
    attn = jax.block_until_ready(attn)

    ref_readout, ref_attn = _reference(x, n_nodes, w_gate, b_gate)
    assert jnp.allclose(readout, ref_readout, atol=1e-5, rtol=1e-5)
    assert jnp.allclose(attn, ref_attn, atol=1e-5, rtol=1e-5)

    print("KERNEL_OK")
</pallas_src>

<mosaic_0001>
module attributes {stable_mosaic.version = 11 : i64} {
  func.func @_gap_kernel(%arg0: i32, %arg1: memref<1x8x32xf32, #tpu.memory_space<vmem>>, %arg2: memref<1x1x1xi32, #tpu.memory_space<vmem>>, %arg3: memref<1x32xf32, #tpu.memory_space<vmem>>, %arg4: memref<1x1xf32, #tpu.memory_space<smem>>, %arg5: memref<1x1x32xf32, #tpu.memory_space<vmem>>, %arg6: memref<1x1x8xf32, #tpu.memory_space<vmem>>) attributes {dimension_semantics = [#tpu.dimension_semantics<parallel>], iteration_bounds = array<i64: 2>, scalar_prefetch = 0 : i64, scratch_operands = 0 : i64, tpu.core_type = #tpu.core_type<tc>, window_params = [{transform_indices = @transform_0, window_bounds = array<i64: 1, 8, 32>}, {transform_indices = @transform_1, window_bounds = array<i64: 1, 1, 1>}, {pipeline_mode = #tpu.pipeline_mode<synchronous>, transform_indices = @transform_2, window_bounds = array<i64: 1, 32>}, {transform_indices = @transform_3, window_bounds = array<i64: 1, 1>}, {transform_indices = @transform_4, window_bounds = array<i64: 1, 1, 32>}, {transform_indices = @transform_5, window_bounds = array<i64: 1, 1, 8>}]} {
    %c0 = arith.constant 0 : index
    %c0_0 = arith.constant 0 : index
    %c0_1 = arith.constant 0 : index
    %0 = vector.load %arg1[%c0, %c0_0, %c0_1] : memref<1x8x32xf32, #tpu.memory_space<vmem>>, vector<1x8x32xf32>
    %c0_2 = arith.constant 0 : index
    %c0_3 = arith.constant 0 : index
    %1 = vector.load %arg3[%c0_2, %c0_3] : memref<1x32xf32, #tpu.memory_space<vmem>>, vector<1x32xf32>
    %c0_4 = arith.constant 0 : index
    %c0_5 = arith.constant 0 : index
    %c0_6 = arith.constant 0 : index
    %2 = vector.load %arg2[%c0_4, %c0_5, %c0_6] : memref<1x1x1xi32, #tpu.memory_space<vmem>>, vector<1x1x1xi32>
    %c0_7 = arith.constant 0 : index
    %c0_8 = arith.constant 0 : index
    %3 = memref.load %arg4[%c0_7, %c0_8] : memref<1x1xf32, #tpu.memory_space<smem>>
    %4 = vector.shape_cast %1 : vector<1x32xf32> to vector<1x1x32xf32>
    "tpu.trace_start"() <{level = 10 : i32, message = "bkd,bnd->bkn"}> : () -> ()
    %cst = arith.constant dense<0.000000e+00> : vector<1x1x8xf32>
    %5 = tpu.matmul %4, %0, %cst {dimension_numbers = #tpu.dot_dimension_numbers<[2], [2], [1], [1], [0, 0, 0, 1, 1, 1], [0], [0]>} : vector<1x1x32xf32>, vector<1x8x32xf32>, vector<1x1x8xf32> -> vector<1x1x8xf32>
    "tpu.trace_stop"() : () -> ()
    %6 = vector.broadcast %3 : f32 to vector<1x1x8xf32>
    %7 = arith.addf %5, %6 : vector<1x1x8xf32>
    %8 = tpu.iota {dimensions = array<i32: 2>} : vector<1x1x8xi32>
    %9 = vector.broadcast %2 : vector<1x1x1xi32> to vector<1x1x8xi32>
    %10 = arith.cmpi slt, %8, %9 : vector<1x1x8xi32>
    %cst_9 = arith.constant 0xFF800000 : f32
    %11 = vector.broadcast %cst_9 : f32 to vector<1x1x8xf32>
    %12 = arith.select %10, %7, %11 : vector<1x1x8xi1>, vector<1x1x8xf32>
    %cst_10 = arith.constant dense<0xFF800000> : vector<1x1xf32>
    %13 = vector.multi_reduction <maximumf>, %12, %cst_10 [2] : vector<1x1x8xf32> to vector<1x1xf32>
    %14 = vector.shape_cast %13 : vector<1x1xf32> to vector<1x1x1xf32>
    %15 = vector.broadcast %14 : vector<1x1x1xf32> to vector<1x1x8xf32>
    %16 = arith.subf %12, %15 : vector<1x1x8xf32>
    %17 = math.exp %16 : vector<1x1x8xf32>
    %cst_11 = arith.constant 0.000000e+00 : f32
    %18 = vector.broadcast %cst_11 : f32 to vector<1x1x8xf32>
    %19 = arith.select %10, %17, %18 : vector<1x1x8xi1>, vector<1x1x8xf32>
    %cst_12 = arith.constant dense<0.000000e+00> : vector<1x1xf32>
    %20 = vector.multi_reduction <add>, %19, %cst_12 [2] : vector<1x1x8xf32> to vector<1x1xf32>
    %21 = vector.shape_cast %20 : vector<1x1xf32> to vector<1x1x1xf32>
    %22 = vector.broadcast %21 : vector<1x1x1xf32> to vector<1x1x8xf32>
    %23 = arith.divf %19, %22 : vector<1x1x8xf32>
    %c0_13 = arith.constant 0 : index
    %c0_14 = arith.constant 0 : index
    %c0_15 = arith.constant 0 : index
    %24 = vector.load %arg6[%c0_13, %c0_14, %c0_15] : memref<1x1x8xf32, #tpu.memory_space<vmem>>, vector<1x1x8xf32>
    tpu.vector_store %arg6[%c0_13, %c0_14, %c0_15], %23 {strides = array<i32>} : memref<1x1x8xf32, #tpu.memory_space<vmem>>, vector<1x1x8xf32>,
    "tpu.trace_start"() <{level = 10 : i32, message = "bqn,bnd->bqd"}> : () -> ()
    %cst_16 = arith.constant dense<0.000000e+00> : vector<1x1x32xf32>
    %25 = tpu.matmul %23, %0, %cst_16 {dimension_numbers = #tpu.dot_dimension_numbers<[2], [1], [1], [2], [0, 0, 0, 1, 1, 2], [0], [0]>} : vector<1x1x8xf32>, vector<1x8x32xf32>, vector<1x1x32xf32> -> vector<1x1x32xf32>
    "tpu.trace_stop"() : () -> ()
    %c0_17 = arith.constant 0 : index
    %c0_18 = arith.constant 0 : index
    %c0_19 = arith.constant 0 : index
    %26 = vector.load %arg5[%c0_17, %c0_18, %c0_19] : memref<1x1x32xf32, #tpu.memory_space<vmem>>, vector<1x1x32xf32>
    tpu.vector_store %arg5[%c0_17, %c0_18, %c0_19], %25 {strides = array<i32>} : memref<1x1x32xf32, #tpu.memory_space<vmem>>, vector<1x1x32xf32>,
    return
  }
  func.func @transform_0(%arg0: i32) -> (i32, i32, i32) {
    %c0_i32 = arith.constant 0 : i32
    %c0_i32_0 = arith.constant 0 : i32
    %c0_i32_1 = arith.constant 0 : i32
    return %arg0, %c0_i32, %c0_i32_0 : i32, i32, i32
  }
  func.func @transform_1(%arg0: i32) -> (i32, i32, i32) {
    %c0_i32 = arith.constant 0 : i32
    %c0_i32_0 = arith.constant 0 : i32
    %c0_i32_1 = arith.constant 0 : i32
    return %arg0, %c0_i32, %c0_i32_0 : i32, i32, i32
  }
  func.func @transform_2(%arg0: i32) -> (i32, i32) {
    %c0_i32 = arith.constant 0 : i32
    %c0_i32_0 = arith.constant 0 : i32
    %c0_i32_1 = arith.constant 0 : i32
    return %c0_i32, %c0_i32_0 : i32, i32
  }
  func.func @transform_3(%arg0: i32) -> (i32, i32) {
    %c0_i32 = arith.constant 0 : i32
    %c0_i32_0 = arith.constant 0 : i32
    %c0_i32_1 = arith.constant 0 : i32
    return %c0_i32, %c0_i32_0 : i32, i32
  }
  func.func @transform_4(%arg0: i32) -> (i32, i32, i32) {
    %c0_i32 = arith.constant 0 : i32
    %c0_i32_0 = arith.constant 0 : i32
    %c0_i32_1 = arith.constant 0 : i32
    return %arg0, %c0_i32, %c0_i32_0 : i32, i32, i32
  }
  func.func @transform_5(%arg0: i32) -> (i32, i32, i32) {
    %c0_i32 = arith.constant 0 : i32
    %c0_i32_0 = arith.constant 0 : i32
    %c0_i32_1 = arith.constant 0 : i32
    return %arg0, %c0_i32, %c0_i32_0 : i32, i32, i32
  }
}

</mosaic_0001>

<llo_original>
// kernel: tpu_custom_call.1
$region0: #{tpu_custom_call.1}
  #allocation0 [shape = 'u32[]', space=smem, size = 0x4, offset = 0x4, fixed_abs, tag = 'smem constant byte address 0x4 - core index']
  #allocation1 [shape = 'u32[144,128]{1,0:T(1,128)}', space=vmem, size = 0x12000, scoped, tag = 'internal scratch']
  #allocation2 [shape = 'f32[1,1]{1,0:T(1,128)S(6)}', space=smem, size = 0x200, scoped, tag = 'scoped memory for tpu_custom_call.1']
  %s0 = inlined_call_operand.hbm [shape: f32[2,8,32], index: 0, kind: input, shape index: {}]
  %s1 = inlined_call_operand.vmem [shape: s32[2,1,1], index: 1, kind: input, shape index: {}]
  %s2 = inlined_call_operand.vmem [shape: f32[1,32], index: 2, kind: input, shape index: {}]
  %s3 = inlined_call_operand.<no memory space> [shape: f32[1,1], index: 3, kind: input, shape index: {}]
  %s4 = inlined_call_operand.hbm [shape: f32[2,1,32], index: 4, kind: output, shape index: {0}]
  %s5 = inlined_call_operand.hbm [shape: f32[2,1,8], index: 5, kind: output, shape index: {1}]
  %6 = xla_tuple %s4, %s5
  %s7 = sld [smem:[#allocation0]]
  $region61: #{tpu_custom_call.1} parent=0
    _
  %s9 = ssub.s32 1, %s7
  %s10 = scalar_select 0, %s9, %s7
  %11 = sst [smem:[#allocation2]] %s3
  $region1: #{tpu_custom_call.1} parent=0
    #allocation3 [shape = 'u8[8192]{0}', space=vmem, size = 0x2000, scoped, tag = 'input window, operand 0']
    #allocation4 [shape = 's32[2]{0}', space=sflag, size = 0x8, scoped, tag = 'scoped memory for tpu_custom_call.1']
    #allocation5 [shape = 's32[2]{0}', space=sflag, size = 0x8, scoped, tag = 'scoped memory for tpu_custom_call.1']
    #allocation6 [shape = 'u8[1024]{0}', space=vmem, size = 0x400, scoped, tag = 'output window, operand 0']
    #allocation7 [shape = 'u8[1024]{0}', space=vmem, size = 0x400, scoped, tag = 'output window, operand 1']
    #allocation8 [shape = 's32[2]{0}', space=sflag, size = 0x8, scoped, tag = 'scoped memory for tpu_custom_call.1']
    %12 = vsyncpa [#allocation4], 0
    %s13 = scalar_lea.sflag [#allocation4], 1
    %14 = vsyncpa %s13, 0
    %15 = vsyncpa [#allocation5], 0
    %s16 = scalar_lea.sflag [#allocation5], 1
    %17 = vsyncpa %s16, 0
    %18 = vsyncpa [#allocation8], 0
    %s19 = scalar_lea.sflag [#allocation8], 1
    %20 = vsyncpa %s19, 0
    loop: start=0, step=1, limit=4
    $region2: #{tpu_custom_call.1} parent=1 // loop_pre_header
      _
    $region3: #{tpu_custom_call.1} parent=1 // loop_header
      %s22 = sphi 0, %s26
      %p23 = scmp.ge.s32.totalorder %s22, 4
      %s32 = sphi 0, %s34
      %s35 = sphi 0, %s32
      %s36 = sphi 0, %s35
      %s52 = sphi 0, %s36
      %s58 = sphi 0, %s60
      %s61 = sphi 0, %s58
      %s62 = sphi 0, %s61
      %s78 = sphi 0, %s62
      %s82 = sphi 0, %s82
      %s84 = sphi 0, %s82
      %s85 = sphi 0, %s84
      %s99 = sphi 0, %s85
      %s103 = sphi 0, %s103
      %s105 = sphi 0, %s103
      %s106 = sphi 0, %s105
      %s120 = sphi 0, %s106
      %s126 = sphi 0, %s128
      %s129 = sphi 0, %s126
      %s130 = sphi 0, %s129
      %s146 = sphi 0, %s130
      %s152 = sphi 0, %s154
      %s155 = sphi 0, %s152
      %s156 = sphi 0, %s155
      %s172 = sphi 0, %s156
    $region4: #{tpu_custom_call.1} parent=1 // loop_header_branch
      %25 = sbr.rel (%p23) target = $region8
    $region5: #{tpu_custom_call.1} parent=1 // loop_body
      %s27 = ssub.s32 %s22, 1
      %s28 = ssub.s32 %s22, 2
      %s29 = sadd.s32 %s22, 1
      %s30 = ssub.s32 %s22, %s29
      %p31 = scmp.eq.s32.totalorder %s30, 0
      %s33 = sadd.s32 %s32, 1
      %s34 = scalar_select %p31, %s32, %s33
      %p37 = pneg %p31
      %p38 = scmp.eq.s32.totalorder %s22, 1
      %p39 = por %p37, %p38
      %p40 = scmp.ne.s32.totalorder %s32, %s35
      %p41 = scmp.eq.s32.totalorder %s22, 0
      %p42 = por %p40, %p41
      %p43 = scmp.ne.s32.totalorder %s32, %s35
      %p44 = scmp.eq.s32.totalorder %s27, 1
      %p45 = por %p43, %p44
      %p46 = scmp.ne.s32.totalorder %s35, %s36
      %p47 = scmp.eq.s32.totalorder %s27, 0
      %p48 = por %p46, %p47
      %p49 = scmp.ne.s32.totalorder %s35, %s36
      %p50 = scmp.eq.s32.totalorder %s28, 1
      %p51 = por %p49, %p50
      %p53 = scmp.ne.s32.totalorder %s36, %s52
      %p54 = scmp.eq.s32.totalorder %s28, 0
      %p55 = por %p53, %p54
      %s56 = ssub.s32 %s22, %s29
      %p57 = scmp.eq.s32.totalorder %s56, 0
      %s59 = sadd.s32 %s58, 1
      %s60 = scalar_select %p57, %s58, %s59
      %p63 = pneg %p57
      %p64 = scmp.eq.s32.totalorder %s22, 1
      %p65 = por %p63, %p64
      %p66 = scmp.ne.s32.totalorder %s58, %s61
      %p67 = scmp.eq.s32.totalorder %s22, 0
      %p68 = por %p66, %p67
      %p69 = scmp.ne.s32.totalorder %s58, %s61
      %p70 = scmp.eq.s32.totalorder %s27, 1
      %p71 = por %p69, %p70
      %p72 = scmp.ne.s32.totalorder %s61, %s62
      %p73 = scmp.eq.s32.totalorder %s27, 0
      %p74 = por %p72, %p73
      %p75 = scmp.ne.s32.totalorder %s61, %s62
      %p76 = scmp.eq.s32.totalorder %s28, 1
      %p77 = por %p75, %p76
      %p79 = scmp.ne.s32.totalorder %s62, %s78
      %p80 = scmp.eq.s32.totalorder %s28, 0
      %p81 = por %p79, %p80
      %s83 = sadd.s32 %s82, 1
      %p86 = scmp.eq.s32.totalorder %s22, 1
      %p87 = scmp.ne.s32.totalorder %s82, %s84
      %p88 = scmp.eq.s32.totalorder %s22, 0
      %p89 = por %p87, %p88
      %p90 = scmp.ne.s32.totalorder %s82, %s84
      %p91 = scmp.eq.s32.totalorder %s27, 1
      %p92 = por %p90, %p91
      %p93 = scmp.ne.s32.totalorder %s84, %s85
      %p94 = scmp.eq.s32.totalorder %s27, 0
      %p95 = por %p93, %p94
      %p96 = scmp.ne.s32.totalorder %s84, %s85
      %p97 = scmp.eq.s32.totalorder %s28, 1
      %p98 = por %p96, %p97
      %p100 = scmp.ne.s32.totalorder %s85, %s99
      %p101 = scmp.eq.s32.totalorder %s28, 0
      %p102 = por %p100, %p101
      %s104 = sadd.s32 %s103, 1
      %p107 = scmp.eq.s32.totalorder %s22, 1
      %p108 = scmp.ne.s32.totalorder %s103, %s105
      %p109 = scmp.eq.s32.totalorder %s22, 0
      %p110 = por %p108, %p109
      %p111 = scmp.ne.s32.totalorder %s103, %s105
      %p112 = scmp.eq.s32.totalorder %s27, 1
      %p113 = por %p111, %p112
      %p114 = scmp.ne.s32.totalorder %s105, %s106
      %p115 = scmp.eq.s32.totalorder %s27, 0
      %p116 = por %p114, %p115
      %p117 = scmp.ne.s32.totalorder %s105, %s106
      %p118 = scmp.eq.s32.totalorder %s28, 1
      %p119 = por %p117, %p118
      %p121 = scmp.ne.s32.totalorder %s106, %s120
      %p122 = scmp.eq.s32.totalorder %s28, 0
      %p123 = por %p121, %p122
      %s124 = ssub.s32 %s22, %s29
      %p125 = scmp.eq.s32.totalorder %s124, 0
      %s127 = sadd.s32 %s126, 1
      %s128 = scalar_select %p125, %s126, %s127
      %p131 = pneg %p125
      %p132 = scmp.eq.s32.totalorder %s22, 1
      %p133 = por %p131, %p132
      %p134 = scmp.ne.s32.totalorder %s126, %s129
      %p135 = scmp.eq.s32.totalorder %s22, 0
      %p136 = por %p134, %p135
      %p137 = scmp.ne.s32.totalorder %s126, %s129
      %p138 = scmp.eq.s32.totalorder %s27, 1
      %p139 = por %p137, %p138
      %p140 = scmp.ne.s32.totalorder %s129, %s130
      %p141 = scmp.eq.s32.totalorder %s27, 0
      %p142 = por %p140, %p141
      %p143 = scmp.ne.s32.totalorder %s129, %s130
      %p144 = scmp.eq.s32.totalorder %s28, 1
      %p145 = por %p143, %p144
      %p147 = scmp.ne.s32.totalorder %s130, %s146
      %p148 = scmp.eq.s32.totalorder %s28, 0
      %p149 = por %p147, %p148
      %s150 = ssub.s32 %s22, %s29
      %p151 = scmp.eq.s32.totalorder %s150, 0
      %s153 = sadd.s32 %s152, 1
      %s154 = scalar_select %p151, %s152, %s153
      %p157 = pneg %p151
      %p158 = scmp.eq.s32.totalorder %s22, 1
      %p159 = por %p157, %p158
      %p160 = scmp.ne.s32.totalorder %s152, %s155
      %p161 = scmp.eq.s32.totalorder %s22, 0
      %p162 = por %p160, %p161
      %p163 = scmp.ne.s32.totalorder %s152, %s155
      %p164 = scmp.eq.s32.totalorder %s27, 1
      %p165 = por %p163, %p164
      %p166 = scmp.ne.s32.totalorder %s155, %s156
      %p167 = scmp.eq.s32.totalorder %s27, 0
      %p168 = por %p166, %p167
      %p169 = scmp.ne.s32.totalorder %s155, %s156
      %p170 = scmp.eq.s32.totalorder %s28, 1
      %p171 = por %p169, %p170
      %p173 = scmp.ne.s32.totalorder %s156, %s172
      %p174 = scmp.eq.s32.totalorder %s28, 0
      %p175 = por %p173, %p174
      %p176 = scmp.le.s32.totalorder 1, %s22
      %p177 = scmp.lt.s32.totalorder %s22, 3
      %p178 = pnand %p176, %p177
      %p179 = pneg %p178
      // Predicated region
      $region9: #{tpu_custom_call.1} parent=5 // pred_check
        _
      $region10: #{tpu_custom_call.1} parent=5 // pred_check_branch
        %181 = sbr.rel (%p178) target = $region12
      $region11: #{tpu_custom_call.1} parent=5 // pred_region
        %s182 = ssub.s32 %s22, 1
        // Predicated region
        $region13: #{tpu_custom_call.1} parent=11 // pred_check
          %p183 = pneg %p95
        $region14: #{tpu_custom_call.1} parent=11 // pred_check_branch
          %185 = sbr.rel (%p183) target = $region16
        $region15: #{tpu_custom_call.1} parent=11 // pred_region
          _
        $region16: #{tpu_custom_call.1} parent=11 // pred_fallthru
          _
        // Predicated region
        $region17: #{tpu_custom_call.1} parent=11 // pred_check
          %p186 = pneg %p116
        $region18: #{tpu_custom_call.1} parent=11 // pred_check_branch
          %188 = sbr.rel (%p186) target = $region20
        $region19: #{tpu_custom_call.1} parent=11 // pred_region
          _
        $region20: #{tpu_custom_call.1} parent=11 // pred_fallthru
          _
      $region12: #{tpu_custom_call.1} parent=5 // pred_fallthru
        _
      %p189 = scmp.lt.s32.totalorder %s22, 2
      // Predicated region
      $region21: #{tpu_custom_call.1} parent=5 // pred_check
        %p190 = pneg %p189
      $region22: #{tpu_custom_call.1} parent=5 // pred_check_branch
        %192 = sbr.rel (%p190) target = $region24
      $region23: #{tpu_custom_call.1} parent=5 // pred_region
        // Predicated region
        $region25: #{tpu_custom_call.1} parent=23 // pred_check
          %p193 = pneg %p42
        $region26: #{tpu_custom_call.1} parent=23 // pred_check_branch
          %195 = sbr.rel (%p193) target = $region28
        $region27: #{tpu_custom_call.1} parent=23 // pred_region
          %s196 = sand.u32 %s32, 1
          %s197 = scalar_lea.sflag [#allocation4], %s196
          %s198 = sand.u32 %s32, 1
          %s199 = smul.addr %s198, 8
          %s200 = scalar_lea.vmem [#allocation3], %s199
          %s202 = ssub.s32 128, 128
          %203 = vsyncadd %s197, %s202
          %s204 = smul.addr %s22, 128
          %s205 = scalar_lea.hbm %s0, %s204
          %s207 = sshll.u32 %s200, 4
          %s208 = int_to_ptr.vmem [resolvable:$true] %s207
          %210 = dma.hbm_to_vmem [thread:$0]  %s205, 128, %s208, %s197
        $region28: #{tpu_custom_call.1} parent=23 // pred_fallthru
          _
        // Predicated region
        $region29: #{tpu_custom_call.1} parent=23 // pred_check
          %p211 = pneg %p68
        $region30: #{tpu_custom_call.1} parent=23 // pred_check_branch
          %213 = sbr.rel (%p211) target = $region32
        $region31: #{tpu_custom_call.1} parent=23 // pred_region
          %p214 = scmp.lt.s32.totalorder %s22, 1
          %s215 = scalar_select %p214, %s22, 1
          %s216 = scalar_lea.vmem %s1, %s215
        $region32: #{tpu_custom_call.1} parent=23 // pred_fallthru
          _
      $region24: #{tpu_custom_call.1} parent=5 // pred_fallthru
        _
      %p217 = scmp.le.s32.totalorder 1, %s22
      %p218 = scmp.lt.s32.totalorder %s22, 3
      %p219 = pnand %p217, %p218
      %p220 = pneg %p219
      // Predicated region
      $region33: #{tpu_custom_call.1} parent=5 // pred_check
        _
      $region34: #{tpu_custom_call.1} parent=5 // pred_check_branch
        %222 = sbr.rel (%p219) target = $region36
      $region35: #{tpu_custom_call.1} parent=5 // pred_region
        %s223 = ssub.s32 %s22, 1
        %s224 = sand.u32 %s35, 1
        %s225 = scalar_lea.sflag [#allocation4], %s224
        %s226 = sand.u32 %s35, 1
        %s227 = smul.addr %s226, 8
        %s228 = scalar_lea.vmem [#allocation3], %s227
        // Predicated region
        $region37: #{tpu_custom_call.1} parent=35 // pred_check
          %p229 = pneg %p48
        $region38: #{tpu_custom_call.1} parent=35 // pred_check_branch
          %231 = sbr.rel (%p229) target = $region40
        $region39: #{tpu_custom_call.1} parent=35 // pred_region
          %232 = dma.done %s225, 128
        $region40: #{tpu_custom_call.1} parent=35 // pred_fallthru
          _
        %s233 = sand.u32 %s35, 1
        %s234 = scalar_lea.sflag [#allocation4], %s233
        %s235 = sand.u32 %s35, 1
        %s236 = smul.addr %s235, 8
        %s237 = scalar_lea.vmem [#allocation3], %s236
        %p238 = pneg %p48
        %p239 = pneg %p45
        %p240 = scmp.lt.s32.totalorder %s27, 1
        %s241 = scalar_select %p240, %s27, 1
        %s242 = scalar_lea.vmem %s1, %s241
        %p243 = pneg %p74
        %p244 = pneg %p71
        %p245 = pneg %p95
        %p246 = pneg %p92
        %p247 = pneg %p116
        %p248 = pneg %p113
        %p249 = pneg %p142
        %p250 = pneg %p139
        %s251 = sand.u32 %s129, 1
        %s252 = scalar_lea.sflag [#allocation5], %s251
        %s253 = sand.u32 %s129, 1
        %s254 = scalar_lea.vmem [#allocation6], %s253
        %p255 = pneg %p168
        %p256 = pneg %p165
        %s257 = sand.u32 %s155, 1
        %s258 = scalar_lea.sflag [#allocation8], %s257
        %s259 = sand.u32 %s155, 1
        %s260 = scalar_lea.vmem [#allocation7], %s259
        %p261 = scmp.lt.s32.totalorder %s27, 1
        %s262 = scalar_select %p261, %s27, 1
        %s263 = scalar_lea.vmem %s1, %s262
        %v264 = vld [vmem:[%s228] sm:$0xff]
        %v265 = vld [vmem:[%s2] sm:$0x1]
        %v266 = vld [vmem:[%s263] sm:$0x1]
        %s267 = sld [smem:[#allocation2]]
        %v268 = vstv %s267
        %vm269 = vcmask 261120
        %v271 = vsel %vm269, %v265, 0
        %v274 = vsel %vm269, %v264, 0
        %276 = vmatprep.subr.mxu0 0.0
        %277 = vmatpush1.xpose.msra.mxu0 %v274
        %278 = vmatprep.subr.mxu0 0.0
        %279 = vmatpush1.xpose.msra.mxu0 0.0
        %280 = vmatprep.subr.mxu0 0.0
        %281 = vmatpush1.xpose.msra.mxu0 0.0
        %282 = vmatprep.subr.mxu0 0.0
        %283 = vmatpush1.xpose.msra.mxu0 0.0
        %284 = vmatprep.subr.mxu0 0.0
        %285 = vmatpush1.xpose.msra.mxu0 0.0
        %286 = vmatprep.subr.mxu0 0.0
        %287 = vmatpush1.xpose.msra.mxu0 0.0
        %288 = vmatprep.subr.mxu0 0.0
        %289 = vmatpush1.xpose.msra.mxu0 0.0
        %290 = vmatprep.subr.mxu0 0.0
        %291 = vmatpush1.xpose.msra.mxu0 0.0
        %292 = vmatprep.subr.mxu0 0.0
        %293 = vmatpush1.xpose.msra.mxu0 0.0
        %294 = vmatprep.subr.mxu0 0.0
        %295 = vmatpush1.xpose.msra.mxu0 0.0
        %296 = vmatprep.subr.mxu0 0.0
        %297 = vmatpush1.xpose.msra.mxu0 0.0
        %298 = vmatprep.subr.mxu0 0.0
        %299 = vmatpush1.xpose.msra.mxu0 0.0
        %300 = vmatprep.subr.mxu0 0.0
        %301 = vmatpush1.xpose.msra.mxu0 0.0
        %302 = vmatprep.subr.mxu0 0.0
        %303 = vmatpush1.xpose.msra.mxu0 0.0
        %304 = vmatprep.subr.mxu0 0.0
        %305 = vmatpush1.xpose.msra.mxu0 0.0
        %306 = vmatprep.subr.mxu0 0.0
        %307 = vmatpush1.xpose.msra.mxu0 0.0
        %308 = vmatprep.subr.mxu0 0.0
        %309 = vmatpush1.xpose.msra.mxu0 0.0
        %310 = vmatprep.subr.mxu0 0.0
        %311 = vmatpush1.xpose.msra.mxu0 0.0
        %312 = vmatprep.subr.mxu0 0.0
        %313 = vmatpush1.xpose.msra.mxu0 0.0
        %314 = vmatprep.subr.mxu0 0.0
        %315 = vmatpush1.xpose.msra.mxu0 0.0
        %316 = vmatprep.subr.mxu0 0.0
        %317 = vmatpush1.xpose.msra.mxu0 0.0
        %318 = vmatprep.subr.mxu0 0.0
        %319 = vmatpush1.xpose.msra.mxu0 0.0
        %320 = vmatprep.subr.mxu0 0.0
        %321 = vmatpush1.xpose.msra.mxu0 0.0
        %322 = vmatprep.subr.mxu0 0.0
        %323 = vmatpush1.xpose.msra.mxu0 0.0
        %324 = vmatprep.subr.mxu0 0.0
        %325 = vmatpush1.xpose.msra.mxu0 0.0
        %326 = vmatprep.subr.mxu0 0.0
        %327 = vmatpush1.xpose.msra.mxu0 0.0
        %328 = vmatprep.subr.mxu0 0.0
        %329 = vmatpush1.xpose.msra.mxu0 0.0
        %330 = vmatprep.subr.mxu0 0.0
        %331 = vmatpush1.xpose.msra.mxu0 0.0
        %332 = vmatprep.subr.mxu0 0.0
        %333 = vmatpush1.xpose.msra.mxu0 0.0
        %334 = vmatprep.subr.mxu0 0.0
        %335 = vmatpush1.xpose.msra.mxu0 0.0
        %336 = vmatprep.subr.mxu0 0.0
        %337 = vmatpush1.xpose.msra.mxu0 0.0
        %338 = vmatprep.subr.mxu0 0.0
        %339 = vmatpush1.xpose.msra.mxu0 0.0
        %340 = vmatprep.mubr.f32.mxu0 0.0
        %341 = vmatmul.mubr.f32.gmra.mrb[0].mxu0 %v271
        %v342 = vpop.f32.mrb[0].mxu0
        %v343 = vadd.f32 %v268, %v342
        %v344 = vpop.f32.mrb[0].mxu0
        %345 = vdwg.mxu0
        %v346 = vlaneseq
        %v347 = vand.u32 %v346, 127
        %348 = vset.pattern.permute.xlu0 0
        %349 = vperm.xlu0 %348, %v266
        %v350 = vpop.permute.xlu0 %349
        %v351 = vlaneseq
        %v352 = vshrl.u32 %v351, 7
        %v353 = vsub.s32 0, %v352
        %v354 = vrot.slane %v350, %v353
        %vm355 = vcmp.lt.s32.totalorder %v347, %v354
        %v356 = vsel %vm355, %v343, -inf
        %vm357 = vcmask 57344
        %v358 = vsel %vm357, %v356, -inf
        %359 = vmax.xlane.f32.xlu0 %v358
        %v360 = vpop.xlane.xlu0 %359
        %v361 = vsub.f32 %v356, %v360
        %v362 = vmul.f32 %v361, 1.442695
        %v363 = vpow.pop %v362
        %v364 = vsel %vm355, %v363, 0.0
        %v365 = vsel %vm357, %v364, 0.0
        %366 = vadd.xlane.f32.xlu0 %v365
        %v367 = vpop.xlane.xlu0 %366
        %v368 = vrcp.pop %v367
        %v369 = vmul.f32 %v364, %v368
        %370 = vst.msk [vmem:[%s260] sm:$0x1] %vm357, %v369
        %vm371 = vcmask 64512
        %v373 = vsel %vm371, %v369, 0
        %375 = vmatprep.subr.mxu0 0.0
        %376 = vmatpush1.msra.mxu0 %v264
        %377 = vmatprep.subr.mxu0 0.0
        %378 = vmatpush1.msra.mxu0 0.0
        %379 = vmatprep.subr.mxu0 0.0
        %380 = vmatpush1.msra.mxu0 0.0
        %381 = vmatprep.subr.mxu0 0.0
        %382 = vmatpush1.msra.mxu0 0.0
        %383 = vmatprep.subr.mxu0 0.0
        %384 = vmatpush1.msra.mxu0 0.0
        %385 = vmatprep.subr.mxu0 0.0
        %386 = vmatpush1.msra.mxu0 0.0
        %387 = vmatprep.subr.mxu0 0.0
        %388 = vmatpush1.msra.mxu0 0.0
        %389 = vmatprep.subr.mxu0 0.0
        %390 = vmatpush1.msra.mxu0 0.0
        %391 = vmatprep.subr.mxu0 0.0
        %392 = vmatpush1.msra.mxu0 0.0
        %393 = vmatprep.subr.mxu0 0.0
        %394 = vmatpush1.msra.mxu0 0.0
        %395 = vmatprep.subr.mxu0 0.0
        %396 = vmatpush1.msra.mxu0 0.0
        %397 = vmatprep.subr.mxu0 0.0
        %398 = vmatpush1.msra.mxu0 0.0
        %399 = vmatprep.subr.mxu0 0.0
        %400 = vmatpush1.msra.mxu0 0.0
        %401 = vmatprep.subr.mxu0 0.0
        %402 = vmatpush1.msra.mxu0 0.0
        %403 = vmatprep.subr.mxu0 0.0
        %404 = vmatpush1.msra.mxu0 0.0
        %405 = vmatprep.subr.mxu0 0.0
        %406 = vmatpush1.msra.mxu0 0.0
        %407 = vmatprep.subr.mxu0 0.0
        %408 = vmatpush1.msra.mxu0 0.0
        %409 = vmatprep.subr.mxu0 0.0
        %410 = vmatpush1.msra.mxu0 0.0
        %411 = vmatprep.subr.mxu0 0.0
        %412 = vmatpush1.msra.mxu0 0.0
        %413 = vmatprep.subr.mxu0 0.0
        %414 = vmatpush1.msra.mxu0 0.0
        %415 = vmatprep.subr.mxu0 0.0
        %416 = vmatpush1.msra.mxu0 0.0
        %417 = vmatprep.subr.mxu0 0.0
        %418 = vmatpush1.msra.mxu0 0.0
        %419 = vmatprep.subr.mxu0 0.0
        %420 = vmatpush1.msra.mxu0 0.0
        %421 = vmatprep.subr.mxu0 0.0
        %422 = vmatpush1.msra.mxu0 0.0
        %423 = vmatprep.subr.mxu0 0.0
        %424 = vmatpush1.msra.mxu0 0.0
        %425 = vmatprep.subr.mxu0 0.0
        %426 = vmatpush1.msra.mxu0 0.0
        %427 = vmatprep.subr.mxu0 0.0
        %428 = vmatpush1.msra.mxu0 0.0
        %429 = vmatprep.subr.mxu0 0.0
        %430 = vmatpush1.msra.mxu0 0.0
        %431 = vmatprep.subr.mxu0 0.0
        %432 = vmatpush1.msra.mxu0 0.0
        %433 = vmatprep.subr.mxu0 0.0
        %434 = vmatpush1.msra.mxu0 0.0
        %435 = vmatprep.subr.mxu0 0.0
        %436 = vmatpush1.msra.mxu0 0.0
        %437 = vmatprep.subr.mxu0 0.0
        %438 = vmatpush1.msra.mxu0 0.0
        %439 = vmatprep.mubr.f32.mxu0 0.0
        %440 = vmatmul.mubr.f32.gmra.mrb[0].mxu0 %v373
        %v441 = vpop.f32.mrb[0].mxu0
        %v442 = vadd.f32 0.0, %v441
        %v443 = vpop.f32.mrb[0].mxu0
        %444 = vdwg.mxu0
        %vm445 = vcmask 253952
        %446 = vst.msk [vmem:[%s254] sm:$0x1] %vm445, %v442
        %s447 = sand.u32 %s129, 1
        %s448 = scalar_lea.sflag [#allocation5], %s447
        %s449 = sand.u32 %s129, 1
        %s450 = scalar_lea.vmem [#allocation6], %s449
        %s451 = sand.u32 %s155, 1
        %s452 = scalar_lea.sflag [#allocation8], %s451
        %s453 = sand.u32 %s155, 1
        %s454 = scalar_lea.vmem [#allocation7], %s453
        // Predicated region
        $region41: #{tpu_custom_call.1} parent=35 // pred_check
          %p455 = pneg %p139
        $region42: #{tpu_custom_call.1} parent=35 // pred_check_branch
          %457 = sbr.rel (%p455) target = $region44
        $region43: #{tpu_custom_call.1} parent=35 // pred_region
          %s459 = ssub.s32 16, 16
          %460 = vsyncadd %s448, %s459
          %s461 = smul.addr %s27, 16
          %s462 = scalar_lea.hbm %s4, %s461
          %s464 = sshll.u32 %s450, 4
          %s465 = int_to_ptr.vmem [resolvable:$true] %s464
          %467 = dma.vmem_to_hbm [thread:$0]  %s465, 16, %s462, %s448
        $region44: #{tpu_custom_call.1} parent=35 // pred_fallthru
          _
        // Predicated region
        $region45: #{tpu_custom_call.1} parent=35 // pred_check
          %p468 = pneg %p165
        $region46: #{tpu_custom_call.1} parent=35 // pred_check_branch
          %470 = sbr.rel (%p468) target = $region48
        $region47: #{tpu_custom_call.1} parent=35 // pred_region
          %s472 = ssub.s32 16, 16
          %473 = vsyncadd %s452, %s472
          %s474 = smul.addr %s27, 16
          %s475 = scalar_lea.hbm %s5, %s474
          %s477 = sshll.u32 %s454, 4
          %s478 = int_to_ptr.vmem [resolvable:$true] %s477
          %480 = dma.vmem_to_hbm [thread:$0]  %s478, 16, %s475, %s452
        $region48: #{tpu_custom_call.1} parent=35 // pred_fallthru
          _
      $region36: #{tpu_custom_call.1} parent=5 // pred_fallthru
        _
      %p481 = scmp.le.s32.totalorder 2, %s22
      // Predicated region
      $region49: #{tpu_custom_call.1} parent=5 // pred_check
        %p482 = pneg %p481
      $region50: #{tpu_custom_call.1} parent=5 // pred_check_branch
        %484 = sbr.rel (%p482) target = $region52
      $region51: #{tpu_custom_call.1} parent=5 // pred_region
        %s485 = ssub.s32 %s22, 2
        // Predicated region
        $region53: #{tpu_custom_call.1} parent=51 // pred_check
          %p486 = pneg %p145
        $region54: #{tpu_custom_call.1} parent=51 // pred_check_branch
          %488 = sbr.rel (%p486) target = $region56
        $region55: #{tpu_custom_call.1} parent=51 // pred_region
          %s489 = sand.u32 %s130, 1
          %s490 = scalar_lea.sflag [#allocation5], %s489
          %s491 = sand.u32 %s130, 1
          %s492 = scalar_lea.vmem [#allocation6], %s491
          %493 = dma.done %s490, 16
        $region56: #{tpu_custom_call.1} parent=51 // pred_fallthru
          _
        // Predicated region
        $region57: #{tpu_custom_call.1} parent=51 // pred_check
          %p494 = pneg %p171
        $region58: #{tpu_custom_call.1} parent=51 // pred_check_branch
          %496 = sbr.rel (%p494) target = $region60
        $region59: #{tpu_custom_call.1} parent=51 // pred_region
          %s497 = sand.u32 %s156, 1
          %s498 = scalar_lea.sflag [#allocation8], %s497
          %s499 = sand.u32 %s156, 1
          %s500 = scalar_lea.vmem [#allocation7], %s499
          %501 = dma.done %s498, 16
        $region60: #{tpu_custom_call.1} parent=51 // pred_fallthru
          _
      $region52: #{tpu_custom_call.1} parent=5 // pred_fallthru
        _
    $region6: #{tpu_custom_call.1} parent=1 // loop_footer
      %s26 = sadd.s32 1, %s22
    $region7: #{tpu_custom_call.1} parent=1 // loop_footer_branch
      %21 = sbr.rel target = $region3
    $region8: #{tpu_custom_call.1} parent=1 // loop_exit
      _
    %502 = vsyncpa [#allocation4], 1
    %s503 = scalar_lea.sflag [#allocation4], 1
    %504 = vsyncpa %s503, 1
    %505 = vsyncpa [#allocation5], 1
    %s506 = scalar_lea.sflag [#allocation5], 1
    %507 = vsyncpa %s506, 1
    %508 = vsyncpa [#allocation8], 1
    %s509 = scalar_lea.sflag [#allocation8], 1
    %510 = vsyncpa %s509, 1

</llo_original>
